<compile_context>
chip_gen: v6e
topology: v6e:2x2x1
jax: 0.10.0
libtpu: 0.0.40
codegen_flags: <defaults>
</compile_context>

<pallas_src>
import functools

import jax
import jax.numpy as jnp
from jax import lax
from jax.experimental import pallas as pl
from jax.experimental.pallas import tpu as pltpu


def _round_up(v, m):
    return (v + m - 1) // m * m


def _vmem_capacity_bytes():
    """Physical VMEM per TensorCore; conservative fallback if query fails."""
    try:
        cap = int(pltpu.get_tpu_info().vmem_capacity_bytes)
        if cap > 0:
            return cap
    except Exception:
        pass
    return 64 * 1024 * 1024          # v7x per-TC size (conservative)


def _num_tensorcores_per_chip():
    try:
        kind = jax.devices()[0].device_kind.lower()
        if "v7" in kind or "7x" in kind:
            return 2
    except Exception:
        pass
    return 1


def _prep_gate_weight(w, hidden, hidden_padded, perm):
    """Reorder gate blocks (perm over [i,f,g,o]) and pad each to hidden_padded."""
    lead = w.shape[:-1]
    w4 = w.astype(jnp.float32).reshape(*lead, 4, hidden)
    w4 = jnp.stack([w4[..., g, :] for g in perm], axis=-2)
    pad = [(0, 0)] * (w4.ndim - 1) + [(0, hidden_padded - hidden)]
    return jnp.pad(w4, pad).reshape(*lead, 4 * hidden_padded)


# ---------------------------------------------------------------------------
# Stage 1: hoisted input projection  gx = X @ W_x + b  (all timesteps at once)
# ---------------------------------------------------------------------------
def _input_projection_kernel(x_ref, wx_ref, b_ref, out_ref):
    out_ref[...] = (
        jnp.dot(x_ref[...], wx_ref[...], preferred_element_type=jnp.float32)
        + b_ref[...]
    ).astype(out_ref.dtype)


# ---------------------------------------------------------------------------
# Stage 2: recurrence.  grid = (batch tiles, time chunks), time loop inside.
# ---------------------------------------------------------------------------
def _lstm_recurrence_kernel(gx_ref, wh_ref, h_out_ref, c_out_ref, h_sc, c_sc,
                            *, seq, tc_len, unroll):
    t_chunk = pl.program_id(1)
    n_tchunks = pl.num_programs(1)

    @pl.when(t_chunk == 0)
    def _():
        h_sc[...] = jnp.zeros_like(h_sc)
        c_sc[...] = jnp.zeros_like(c_sc)

    wh = wh_ref[...]                      # (Hp, 4*Hp), resident (constant index)
    bt, hp = h_out_ref.shape
    base = t_chunk * tc_len               # global timestep of this chunk's start

    def step(t, carry):
        h, c = carry                      # f32 carries
        # Only the recurrent matmul is on the serial critical path; x@W_x + b
        # was precomputed for all t in stage 1 (stored bf16 on the perf path).
        gates = gx_ref[t].astype(jnp.float32) + jnp.dot(
            h.astype(wh.dtype), wh, preferred_element_type=jnp.float32)
        # Gate layout [i | f | o | g]: one contiguous sigmoid slab, one tanh.
        sig = jax.nn.sigmoid(gates[:, : 3 * hp])
        i_t = sig[:, 0 * hp:1 * hp]
        f_t = sig[:, 1 * hp:2 * hp]
        o_t = sig[:, 2 * hp:3 * hp]
        g_t = jnp.tanh(gates[:, 3 * hp:4 * hp])
        c_new = f_t * c + i_t * g_t
        h_new = o_t * jnp.tanh(c_new)
        # Mask padded timesteps in the (possibly partial) last chunk.
        valid = (base + t) < seq
        return jnp.where(valid, h_new, h), jnp.where(valid, c_new, c)

    h_fin, c_fin = lax.fori_loop(0, tc_len, step, (h_sc[...], c_sc[...]),
                                 unroll=unroll)
    h_sc[...] = h_fin
    c_sc[...] = c_fin

    @pl.when(t_chunk == n_tchunks - 1)
    def _():
        h_out_ref[...] = h_fin.astype(h_out_ref.dtype)
        c_out_ref[...] = c_fin.astype(c_out_ref.dtype)


def lstm_forward(x, w_x, w_h, b, *, matmul_dtype=jnp.bfloat16):
    """LSTM forward.

    x:   (batch, seq, input_size)
    w_x: (input_size, 4*hidden) = [W_ii | W_if | W_ig | W_io]
    w_h: (hidden,     4*hidden) = [W_hi | W_hf | W_hg | W_ho]
    b:   (4*hidden,)            = [b_i  | b_f  | b_g  | b_o ]
    returns (h_T, c_T), each (batch, hidden), float32.
    """
    batch, seq, input_size = x.shape
    hidden = w_h.shape[0]
    assert w_x.shape == (input_size, 4 * hidden)
    assert w_h.shape == (hidden, 4 * hidden)

    hp = _round_up(hidden, 128)        # lane-aligned hidden
    bp = _round_up(batch, 8)           # sublane-aligned batch
    g4 = 4 * hp

    gate_dtype = matmul_dtype          # bf16 slab on perf path, f32 on exact path
    in_item = jnp.dtype(matmul_dtype).itemsize
    gx_item = jnp.dtype(gate_dtype).itemsize

    vmem_cap = _vmem_capacity_bytes()
    vmem_budget = vmem_cap - max(vmem_cap // 8, 8 << 20)   # compiler headroom

    # ---- parameter prep: reorder gates to [i,f,o,g], pad, cast ----
    perm = (0, 1, 3, 2)                                     # [i,f,g,o] -> [i,f,o,g]
    wx_p = _prep_gate_weight(w_x, hidden, hp, perm)         # (in, 4Hp)
    wh_p = _prep_gate_weight(w_h, hidden, hp, perm)         # (H, 4Hp)
    wh_p = jnp.pad(wh_p, ((0, hp - hidden), (0, 0)))        # (Hp, 4Hp)
    b_p = _prep_gate_weight(b.reshape(1, 4 * hidden), hidden, hp, perm)  # (1, 4Hp)
    wx_m = wx_p.astype(matmul_dtype)
    wh_m = wh_p.astype(matmul_dtype)

    # ---- time-major, batch-padded input ----
    x_tm = jnp.transpose(x, (1, 0, 2)).astype(jnp.float32)  # (seq, B, in)
    if bp != batch:
        x_tm = jnp.pad(x_tm, ((0, 0), (0, bp - batch), (0, 0)))
    x2d = x_tm.reshape(seq * bp, input_size).astype(matmul_dtype)

    # ---- stage 1: one (seq*Bp, in) @ (in, 4Hp) matmul, tiled over M and N ----
    m_rows = seq * bp
    tm_target = 512 if vmem_cap >= (96 << 20) else 256      # bigger tiles on 128-MiB chips
    tm = min(m_rows, tm_target)
    while m_rows % tm != 0:
        tm -= 8
    if g4 <= 2048:
        tn = g4
    else:
        tn = 2048
        while g4 % tn != 0:
            tn -= 512

    def _s1_bytes(tm_, tn_):
        return 2 * (tm_ * input_size * in_item              # x tile (dbl-buf)
                    + input_size * tn_ * in_item            # W_x tile
                    + tn_ * 4                                # bias tile
                    + tm_ * tn_ * gx_item)                   # out tile
    while _s1_bytes(tm, tn) > vmem_budget and tm > 8:
        tm = max(8, tm // 2)
        while m_rows % tm != 0:
            tm -= 8
    s1_vmem = int(min(max(_s1_bytes(tm, tn) + (2 << 20), 16 << 20), vmem_budget))

    proj_cost = pl.CostEstimate(
        flops=int(2 * m_rows * input_size * g4),
        transcendentals=0,
        bytes_accessed=int(x2d.size * in_item + wx_m.size * in_item
                           + g4 * 4 + m_rows * g4 * gx_item),
    )
    gx2d = pl.pallas_call(
        _input_projection_kernel,
        out_shape=jax.ShapeDtypeStruct((m_rows, g4), gate_dtype),
        grid=(m_rows // tm, g4 // tn),
        in_specs=[
            pl.BlockSpec((tm, input_size), lambda i, j: (i, 0)),
            pl.BlockSpec((input_size, tn), lambda i, j: (0, j)),
            pl.BlockSpec((1, tn), lambda i, j: (0, j)),
        ],
        out_specs=pl.BlockSpec((tm, tn), lambda i, j: (i, j)),
        compiler_params=pltpu.CompilerParams(
            dimension_semantics=("parallel", "parallel"),
            vmem_limit_bytes=s1_vmem),
        cost_estimate=proj_cost,
    )(x2d, wx_m, b_p)
    gx = gx2d.reshape(seq, bp, g4)                           # free reshape

    # ---- stage 2: recurrence over time inside the kernel ----
    # Split batch only with >=2 TensorCores and MXU-meaningful tiles (bp>=256);
    # on single-TC chips (v5e/v6e) splitting just serializes and re-fetches W_h.
    two_tc = _num_tensorcores_per_chip() >= 2
    n_btiles = 2 if (two_tc and bp >= 256 and bp % 16 == 0) else 1
    bt = bp // n_btiles

    # Time-chunk length from the VMEM budget (double-buffered gx chunk +
    # double-buffered W_h + f32 carries + double-buffered outputs).
    wh_item = jnp.dtype(matmul_dtype).itemsize
    fixed = (2 * hp * g4 * wh_item          # W_h (pipeline double buffer)
             + 2 * bt * hp * 4              # h/c scratch
             + 2 * 2 * bt * hp * 4          # h/c outputs (double buffered)
             + (2 << 20))                   # headroom
    per_step = 2 * bt * g4 * gx_item        # gx per timestep (double buffered)
    max_steps = max(8, int((vmem_budget - fixed) // per_step))
    tc_len = seq if max_steps >= seq else max(8, (max_steps // 8) * 8)
    n_tchunks = pl.cdiv(seq, tc_len)

    if tc_len <= 16:
        unroll = True                       # fully unroll short fixed loops
    elif tc_len % 4 == 0:
        unroll = 4
    elif tc_len % 2 == 0:
        unroll = 2
    else:
        unroll = 1

    rec_cost = pl.CostEstimate(
        flops=int(2 * seq * bp * hp * g4 + 10 * seq * bp * hp),
        transcendentals=int(5 * seq * bp * hp),
        bytes_accessed=int(seq * bp * g4 * gx_item
                           + n_btiles * hp * g4 * wh_item
                           + 2 * bp * hp * 4),
    )
    s2_vmem = int(min(max(fixed + tc_len * per_step, 16 << 20), vmem_budget))

    kern = functools.partial(_lstm_recurrence_kernel,
                             seq=seq, tc_len=tc_len, unroll=unroll)
    h_p, c_p = pl.pallas_call(
        kern,
        out_shape=(jax.ShapeDtypeStruct((bp, hp), jnp.float32),
                   jax.ShapeDtypeStruct((bp, hp), jnp.float32)),
        grid=(n_btiles, n_tchunks),
        in_specs=[
            # contiguous per-(batch-tile, time-chunk) gate slab
            pl.BlockSpec((tc_len, bt, g4), lambda i, t: (t, i, 0)),
            # W_h: constant index -> fetched in the prologue, revisit-cached
            pl.BlockSpec((hp, g4), lambda i, t: (0, 0)),
        ],
        out_specs=(pl.BlockSpec((bt, hp), lambda i, t: (i, 0)),
                   pl.BlockSpec((bt, hp), lambda i, t: (i, 0))),
        scratch_shapes=[
            pltpu.VMEM((bt, hp), jnp.float32),   # h carry across time chunks
            pltpu.VMEM((bt, hp), jnp.float32),   # c carry across time chunks
        ],
        compiler_params=pltpu.CompilerParams(
            dimension_semantics=("parallel", "arbitrary"),
            vmem_limit_bytes=s2_vmem),
        cost_estimate=rec_cost,
    )(gx, wh_m)

    return h_p[:batch, :hidden], c_p[:batch, :hidden]


def _xavier_uniform(key, shape):
    fan_in, fan_out = shape
    bound = jnp.sqrt(6.0 / (fan_in + fan_out))
    return jax.random.uniform(key, shape, jnp.float32, -bound, bound)


def lstm_ref(x, w_x, w_h, b):
    """Pure-JAX reference matching the PyTorch forward exactly."""
    batch, seq, _ = x.shape
    hidden = w_h.shape[0]
    h = jnp.zeros((batch, hidden), jnp.float32)
    c = jnp.zeros((batch, hidden), jnp.float32)
    for i in range(seq):
        x_t = x[:, i, :]
        gates = x_t @ w_x + h @ w_h + b
        H = hidden
        i_t = jax.nn.sigmoid(gates[:, 0 * H:1 * H])
        f_t = jax.nn.sigmoid(gates[:, 1 * H:2 * H])
        g_t = jnp.tanh(gates[:, 2 * H:3 * H])
        o_t = jax.nn.sigmoid(gates[:, 3 * H:4 * H])
        c = f_t * c + i_t * g_t
        h = o_t * jnp.tanh(c)
    return h, c


if __name__ == "__main__":
    batch, seq, input_size, hidden = 2, 8, 16, 32

    key = jax.random.PRNGKey(0)
    keys = jax.random.split(key, 16)

    # Deterministic parameter init mirroring nn.init.xavier_uniform_ / zeros_.
    W_ii = _xavier_uniform(keys[0], (input_size, hidden))
    W_if = _xavier_uniform(keys[1], (input_size, hidden))
    W_ig = _xavier_uniform(keys[2], (input_size, hidden))
    W_io = _xavier_uniform(keys[3], (input_size, hidden))
    W_hi = _xavier_uniform(keys[4], (hidden, hidden))
    W_hf = _xavier_uniform(keys[5], (hidden, hidden))
    W_hg = _xavier_uniform(keys[6], (hidden, hidden))
    W_ho = _xavier_uniform(keys[7], (hidden, hidden))
    b_i = jnp.zeros((hidden,), jnp.float32)
    b_f = jnp.zeros((hidden,), jnp.float32)
    b_g = jnp.zeros((hidden,), jnp.float32)
    b_o = jnp.zeros((hidden,), jnp.float32)

    w_x = jnp.concatenate([W_ii, W_if, W_ig, W_io], axis=1)  # (in, 4H)
    w_h = jnp.concatenate([W_hi, W_hf, W_hg, W_ho], axis=1)  # (H, 4H)
    b = jnp.concatenate([b_i, b_f, b_g, b_o], axis=0)        # (4H,)

    x = jax.random.normal(keys[8], (batch, seq, input_size), jnp.float32)

    h_ref, c_ref = lstm_ref(x, w_x, w_h, b)

    # Exact-precision path (f32 matmul operands + f32 gate slab) -- strict check.
    h32, c32 = lstm_forward(x, w_x, w_h, b, matmul_dtype=jnp.float32)
    jax.block_until_ready((h32, c32))
    assert h32.shape == (batch, hidden) and c32.shape == (batch, hidden)
    assert jnp.allclose(h32, h_ref, atol=1e-3, rtol=1e-3), "h_t mismatch (f32)"
    assert jnp.allclose(c32, c_ref, atol=1e-3, rtol=1e-3), "c_t mismatch (f32)"

    # Performance path (bf16 matmul operands + bf16 gate slab, f32 carries).
    hbf, cbf = lstm_forward(x, w_x, w_h, b, matmul_dtype=jnp.bfloat16)
    jax.block_until_ready((hbf, cbf))
    assert jnp.allclose(hbf, h_ref, atol=7e-2, rtol=7e-2), "h_t mismatch (bf16)"
    assert jnp.allclose(cbf, c_ref, atol=7e-2, rtol=7e-2), "c_t mismatch (bf16)"

    print("KERNEL_OK")
</pallas_src>

<mosaic_0001>
module attributes {stable_mosaic.version = 11 : i64} {
  func.func @_input_projection_kernel(%arg0: i32, %arg1: i32, %arg2: memref<64x16xf32, #tpu.memory_space<vmem>>, %arg3: memref<16x512xf32, #tpu.memory_space<vmem>>, %arg4: memref<1x512xf32, #tpu.memory_space<vmem>>, %arg5: memref<64x512xf32, #tpu.memory_space<vmem>>) attributes {dimension_semantics = [#tpu.dimension_semantics<parallel>, #tpu.dimension_semantics<parallel>], iteration_bounds = array<i64: 1, 1>, scalar_prefetch = 0 : i64, scratch_operands = 0 : i64, tpu.core_type = #tpu.core_type<tc>, window_params = [{transform_indices = @transform_0, window_bounds = array<i64: 64, 16>}, {transform_indices = @transform_1, window_bounds = array<i64: 16, 512>}, {transform_indices = @transform_2, window_bounds = array<i64: 1, 512>}, {transform_indices = @transform_3, window_bounds = array<i64: 64, 512>}]} {
    %c0 = arith.constant 0 : index
    %c0_0 = arith.constant 0 : index
    %0 = vector.load %arg2[%c0, %c0_0] : memref<64x16xf32, #tpu.memory_space<vmem>>, vector<64x16xf32>
    %c0_1 = arith.constant 0 : index
    %c0_2 = arith.constant 0 : index
    %1 = vector.load %arg3[%c0_1, %c0_2] : memref<16x512xf32, #tpu.memory_space<vmem>>, vector<16x512xf32>
    %cst = arith.constant dense<0.000000e+00> : vector<64x512xf32>
    %2 = tpu.matmul %0, %1, %cst {dimension_numbers = #tpu.dot_dimension_numbers<[1], [0], [0], [1], [0, 0, 1, 1], [], []>} : vector<64x16xf32>, vector<16x512xf32>, vector<64x512xf32> -> vector<64x512xf32>
    %c0_3 = arith.constant 0 : index
    %c0_4 = arith.constant 0 : index
    %3 = vector.load %arg4[%c0_3, %c0_4] : memref<1x512xf32, #tpu.memory_space<vmem>>, vector<1x512xf32>
    %4 = vector.broadcast %3 : vector<1x512xf32> to vector<64x512xf32>
    %5 = arith.addf %2, %4 : vector<64x512xf32>
    %c0_5 = arith.constant 0 : index
    %c0_6 = arith.constant 0 : index
    %6 = vector.load %arg5[%c0_5, %c0_6] : memref<64x512xf32, #tpu.memory_space<vmem>>, vector<64x512xf32>
    tpu.vector_store %arg5[%c0_5, %c0_6], %5 {strides = array<i32>} : memref<64x512xf32, #tpu.memory_space<vmem>>, vector<64x512xf32>,
    return
  }
  func.func @transform_0(%arg0: i32, %arg1: i32) -> (i32, i32) {
    %c0_i32 = arith.constant 0 : i32
    %c0_i32_0 = arith.constant 0 : i32
    return %arg0, %c0_i32 : i32, i32
  }
  func.func @transform_1(%arg0: i32, %arg1: i32) -> (i32, i32) {
    %c0_i32 = arith.constant 0 : i32
    %c0_i32_0 = arith.constant 0 : i32
    return %c0_i32, %arg1 : i32, i32
  }
  func.func @transform_2(%arg0: i32, %arg1: i32) -> (i32, i32) {
    %c0_i32 = arith.constant 0 : i32
    %c0_i32_0 = arith.constant 0 : i32
    return %c0_i32, %arg1 : i32, i32
  }
  func.func @transform_3(%arg0: i32, %arg1: i32) -> (i32, i32) {
    %c0_i32 = arith.constant 0 : i32
    return %arg0, %arg1 : i32, i32
  }
}

</mosaic_0001>

<llo_original>
// kernel: tpu_custom_call.1
$region0: #{tpu_custom_call.1}
  #allocation0 [shape = 'u32[]', space=smem, size = 0x4, offset = 0x4, fixed_abs, tag = 'smem constant byte address 0x4 - core index']
  #allocation1 [shape = 'u32[144,128]{1,0:T(1,128)}', space=vmem, size = 0x12000, scoped, tag = 'internal scratch']
  %s0 = inlined_call_operand.vmem [shape: f32[64,16], index: 0, kind: input, shape index: {}]
  %s1 = inlined_call_operand.vmem [shape: f32[16,512], index: 1, kind: input, shape index: {}]
  %s2 = inlined_call_operand.vmem [shape: f32[1,512], index: 2, kind: input, shape index: {}]
  %s3 = inlined_call_operand.hbm [shape: f32[64,512], index: 3, kind: output, shape index: {}]
  %s4 = sld [smem:[#allocation0]]
  $region22: #{tpu_custom_call.1} parent=0
    _
  %s6 = ssub.s32 1, %s4
  %s7 = scalar_select 0, %s6, %s4
  $region1: #{tpu_custom_call.1} parent=0
    #allocation2 [shape = 'u8[131072]{0}', space=vmem, size = 0x20000, scoped, tag = 'output window, operand 0, single buffered']
    #allocation3 [shape = 's32[1]{0}', space=sflag, size = 0x4, scoped, tag = 'scoped memory for tpu_custom_call.1']
    %8 = vsyncpa [#allocation3], 0
    // Predicated region
    $region2: #{tpu_custom_call.1} parent=1 // pred_check
      _
    $region3: #{tpu_custom_call.1} parent=1 // pred_check_branch
      %10 = sbr.rel (0) target = $region5
    $region4: #{tpu_custom_call.1} parent=1 // pred_region
      _
    $region5: #{tpu_custom_call.1} parent=1 // pred_fallthru
      _
    // Predicated region
    $region6: #{tpu_custom_call.1} parent=1 // pred_check
      _
    $region7: #{tpu_custom_call.1} parent=1 // pred_check_branch
      %12 = sbr.rel (0) target = $region9
    $region8: #{tpu_custom_call.1} parent=1 // pred_region
      _
    $region9: #{tpu_custom_call.1} parent=1 // pred_fallthru
      _
    // Predicated region
    $region10: #{tpu_custom_call.1} parent=1 // pred_check
      _
    $region11: #{tpu_custom_call.1} parent=1 // pred_check_branch
      %14 = sbr.rel (0) target = $region13
    $region12: #{tpu_custom_call.1} parent=1 // pred_region
      _
    $region13: #{tpu_custom_call.1} parent=1 // pred_fallthru
      _
    %v15 = vld [vmem:[%s0] sm:$0xff]
    %v16 = vld [vmem:[%s0 + $0x8] sm:$0xff]
    %v17 = vld [vmem:[%s0 + $0x10] sm:$0xff]
    %v18 = vld [vmem:[%s0 + $0x18] sm:$0xff]
    %v19 = vld [vmem:[%s0 + $0x20] sm:$0xff]
    %v20 = vld [vmem:[%s0 + $0x28] sm:$0xff]
    %v21 = vld [vmem:[%s0 + $0x30] sm:$0xff]
    %v22 = vld [vmem:[%s0 + $0x38] sm:$0xff]
    %v23 = vld [vmem:[%s1] sm:$0xff]
    %v24 = vld [vmem:[%s1 + $0x8] sm:$0xff]
    %v25 = vld [vmem:[%s1 + $0x10] sm:$0xff]
    %v26 = vld [vmem:[%s1 + $0x18] sm:$0xff]
    %v27 = vld [vmem:[%s1 + $0x20] sm:$0xff]
    %v28 = vld [vmem:[%s1 + $0x28] sm:$0xff]
    %v29 = vld [vmem:[%s1 + $0x30] sm:$0xff]
    %v30 = vld [vmem:[%s1 + $0x38] sm:$0xff]
    %v31 = vld [vmem:[%s2] sm:$0xf]
    %v33 = vlaneseq
    %v34 = vshrl.u32 %v33, 7
    %v35 = vsub.s32 0, %v34
    %v36 = vrot.slane %v31, %v35
    %v37 = vlaneseq
    %v38 = vshrl.u32 %v37, 7
    %v39 = vsub.s32 1, %v38
    %v40 = vrot.slane %v31, %v39
    %v41 = vlaneseq
    %v42 = vshrl.u32 %v41, 7
    %v43 = vsub.s32 2, %v42
    %v44 = vrot.slane %v31, %v43
    %v45 = vlaneseq
    %v46 = vshrl.u32 %v45, 7
    %v47 = vsub.s32 3, %v46
    %v48 = vrot.slane %v31, %v47
    %vm53 = vcmask 130048
    %v55 = vsel %vm53, %v15, 0
    %v58 = vsel %vm53, %v16, 0
    %v61 = vsel %vm53, %v17, 0
    %v64 = vsel %vm53, %v18, 0
    %v67 = vsel %vm53, %v19, 0
    %v70 = vsel %vm53, %v20, 0
    %v73 = vsel %vm53, %v21, 0
    %v76 = vsel %vm53, %v22, 0
    %78 = vmatprep.subr.mxu0 0.0
    %79 = vmatpush1.msra.mxu0 0.0
    %80 = vmatprep.subr.mxu0 0.0
    %81 = vmatpush1.msra.mxu0 0.0
    %82 = vmatprep.subr.mxu0 0.0
    %83 = vmatpush1.msra.mxu0 0.0
    %84 = vmatprep.subr.mxu0 0.0
    %85 = vmatpush1.msra.mxu0 0.0
    %86 = vmatprep.subr.mxu0 0.0
    %87 = vmatpush1.msra.mxu0 0.0
    %88 = vmatprep.subr.mxu0 0.0
    %89 = vmatpush1.msra.mxu0 0.0
    %90 = vmatprep.subr.mxu0 0.0
    %91 = vmatpush1.msra.mxu0 0.0
    %92 = vmatprep.subr.mxu0 0.0
    %93 = vmatpush1.msra.mxu0 0.0
    %94 = vmatprep.subr.mxu0 0.0
    %95 = vmatpush1.msra.mxu0 0.0
    %96 = vmatprep.subr.mxu0 0.0
    %97 = vmatpush1.msra.mxu0 0.0
    %98 = vmatprep.subr.mxu0 0.0
    %99 = vmatpush1.msra.mxu0 0.0
    %100 = vmatprep.subr.mxu0 0.0
    %101 = vmatpush1.msra.mxu0 0.0
    %102 = vmatprep.subr.mxu0 0.0
    %103 = vmatpush1.msra.mxu0 0.0
    %104 = vmatprep.subr.mxu0 0.0
    %105 = vmatpush1.msra.mxu0 0.0
    %106 = vmatprep.subr.mxu0 %v28
    %107 = vmatpush1.msra.mxu0 %v27
    %108 = vmatprep.subr.mxu0 %v24
    %109 = vmatpush1.msra.mxu0 %v23
    %110 = vmatprep.subr.mxu0 0.0
    %111 = vmatpush2.msra.mxu0 0.0
    %112 = vmatprep.subr.mxu0 0.0
    %113 = vmatpush2.msra.mxu0 0.0
    %114 = vmatprep.subr.mxu0 0.0
    %115 = vmatpush2.msra.mxu0 0.0
    %116 = vmatprep.subr.mxu0 0.0
    %117 = vmatpush2.msra.mxu0 0.0
    %118 = vmatprep.subr.mxu0 0.0
    %119 = vmatpush2.msra.mxu0 0.0
    %120 = vmatprep.subr.mxu0 0.0
    %121 = vmatpush2.msra.mxu0 0.0
    %122 = vmatprep.subr.mxu0 0.0
    %123 = vmatpush2.msra.mxu0 0.0
    %124 = vmatprep.subr.mxu0 0.0
    %125 = vmatpush2.msra.mxu0 0.0
    %126 = vmatprep.subr.mxu0 0.0
    %127 = vmatpush2.msra.mxu0 0.0
    %128 = vmatprep.subr.mxu0 0.0
    %129 = vmatpush2.msra.mxu0 0.0
    %130 = vmatprep.subr.mxu0 0.0
    %131 = vmatpush2.msra.mxu0 0.0
    %132 = vmatprep.subr.mxu0 0.0
    %133 = vmatpush2.msra.mxu0 0.0
    %134 = vmatprep.subr.mxu0 0.0
    %135 = vmatpush2.msra.mxu0 0.0
    %136 = vmatprep.subr.mxu0 0.0
    %137 = vmatpush2.msra.mxu0 0.0
    %138 = vmatprep.subr.mxu0 0.0
    %139 = vmatpush2.msra.mxu0 0.0
    %140 = vmatprep.subr.mxu0 0.0
    %141 = vmatpush2.msra.mxu0 0.0
    %142 = vmatprep.mubr.f32.mxu0 0.0
    %143 = vmatmul.mubr.f32.gmra.mxu0 %v55
    %v144 = vpop.f32.mrf.mxu0
    %v145 = vadd.f32 %v36, %v144
    %v146 = vpop.f32.mrf.mxu0
    %v147 = vadd.f32 %v40, %v146
    %148 = vmatprep.mubr.f32.mxu0 0.0
    %149 = vmatmul.mubr.f32.gmra.mxu0 %v58
    %v150 = vpop.f32.mrf.mxu0
    %v151 = vadd.f32 %v36, %v150
    %v152 = vpop.f32.mrf.mxu0
    %v153 = vadd.f32 %v40, %v152
    %154 = vmatprep.mubr.f32.mxu0 0.0
    %155 = vmatmul.mubr.f32.gmra.mxu0 %v61
    %v156 = vpop.f32.mrf.mxu0
    %v157 = vadd.f32 %v36, %v156
    %v158 = vpop.f32.mrf.mxu0
    %v159 = vadd.f32 %v40, %v158
    %160 = vmatprep.mubr.f32.mxu0 0.0
    %161 = vmatmul.mubr.f32.gmra.mxu0 %v64
    %v162 = vpop.f32.mrf.mxu0
    %v163 = vadd.f32 %v36, %v162
    %v164 = vpop.f32.mrf.mxu0
    %v165 = vadd.f32 %v40, %v164
    %166 = vmatprep.mubr.f32.mxu0 0.0
    %167 = vmatmul.mubr.f32.gmra.mxu0 %v67
    %v168 = vpop.f32.mrf.mxu0
    %v169 = vadd.f32 %v36, %v168
    %v170 = vpop.f32.mrf.mxu0
    %v171 = vadd.f32 %v40, %v170
    %172 = vmatprep.mubr.f32.mxu0 0.0
    %173 = vmatmul.mubr.f32.gmra.mxu0 %v70
    %v174 = vpop.f32.mrf.mxu0
    %v175 = vadd.f32 %v36, %v174
    %v176 = vpop.f32.mrf.mxu0
    %v177 = vadd.f32 %v40, %v176
    %178 = vmatprep.mubr.f32.mxu0 0.0
    %179 = vmatmul.mubr.f32.gmra.mxu0 %v73
    %v180 = vpop.f32.mrf.mxu0
    %v181 = vadd.f32 %v36, %v180
    %v182 = vpop.f32.mrf.mxu0
    %v183 = vadd.f32 %v40, %v182
    %184 = vmatprep.mubr.f32.mxu0 0.0
    %185 = vmatmul.mubr.f32.gmra.mxu0 %v76
    %v186 = vpop.f32.mrf.mxu0
    %v187 = vadd.f32 %v36, %v186
    %v188 = vpop.f32.mrf.mxu0
    %v189 = vadd.f32 %v40, %v188
    %190 = vdwg.mxu0
    %191 = vmatprep.subr.mxu0 0.0
    %192 = vmatpush1.msra.mxu0 0.0
    %193 = vmatprep.subr.mxu0 0.0
    %194 = vmatpush1.msra.mxu0 0.0
    %195 = vmatprep.subr.mxu0 0.0
    %196 = vmatpush1.msra.mxu0 0.0
    %197 = vmatprep.subr.mxu0 0.0
    %198 = vmatpush1.msra.mxu0 0.0
    %199 = vmatprep.subr.mxu0 0.0
    %200 = vmatpush1.msra.mxu0 0.0
    %201 = vmatprep.subr.mxu0 0.0
    %202 = vmatpush1.msra.mxu0 0.0
    %203 = vmatprep.subr.mxu0 0.0
    %204 = vmatpush1.msra.mxu0 0.0
    %205 = vmatprep.subr.mxu0 0.0
    %206 = vmatpush1.msra.mxu0 0.0
    %207 = vmatprep.subr.mxu0 0.0
    %208 = vmatpush1.msra.mxu0 0.0
    %209 = vmatprep.subr.mxu0 0.0
    %210 = vmatpush1.msra.mxu0 0.0
    %211 = vmatprep.subr.mxu0 0.0
    %212 = vmatpush1.msra.mxu0 0.0
    %213 = vmatprep.subr.mxu0 0.0
    %214 = vmatpush1.msra.mxu0 0.0
    %215 = vmatprep.subr.mxu0 0.0
    %216 = vmatpush1.msra.mxu0 0.0
    %217 = vmatprep.subr.mxu0 0.0
    %218 = vmatpush1.msra.mxu0 0.0
    %219 = vmatprep.subr.mxu0 %v30
    %220 = vmatpush1.msra.mxu0 %v29
    %221 = vmatprep.subr.mxu0 %v26
    %222 = vmatpush1.msra.mxu0 %v25
    %223 = vmatprep.subr.mxu0 0.0
    %224 = vmatpush2.msra.mxu0 0.0
    %225 = vmatprep.subr.mxu0 0.0
    %226 = vmatpush2.msra.mxu0 0.0
    %227 = vmatprep.subr.mxu0 0.0
    %228 = vmatpush2.msra.mxu0 0.0
    %229 = vmatprep.subr.mxu0 0.0
    %230 = vmatpush2.msra.mxu0 0.0
    %231 = vmatprep.subr.mxu0 0.0
    %232 = vmatpush2.msra.mxu0 0.0
    %233 = vmatprep.subr.mxu0 0.0
    %234 = vmatpush2.msra.mxu0 0.0
    %235 = vmatprep.subr.mxu0 0.0
    %236 = vmatpush2.msra.mxu0 0.0
    %237 = vmatprep.subr.mxu0 0.0
    %238 = vmatpush2.msra.mxu0 0.0
    %239 = vmatprep.subr.mxu0 0.0
    %240 = vmatpush2.msra.mxu0 0.0
    %241 = vmatprep.subr.mxu0 0.0
    %242 = vmatpush2.msra.mxu0 0.0
    %243 = vmatprep.subr.mxu0 0.0
    %244 = vmatpush2.msra.mxu0 0.0
    %245 = vmatprep.subr.mxu0 0.0
    %246 = vmatpush2.msra.mxu0 0.0
    %247 = vmatprep.subr.mxu0 0.0
    %248 = vmatpush2.msra.mxu0 0.0
    %249 = vmatprep.subr.mxu0 0.0
    %250 = vmatpush2.msra.mxu0 0.0
    %251 = vmatprep.subr.mxu0 0.0
    %252 = vmatpush2.msra.mxu0 0.0
    %253 = vmatprep.subr.mxu0 0.0
    %254 = vmatpush2.msra.mxu0 0.0
    %255 = vmatprep.mubr.f32.mxu0 0.0
    %256 = vmatmul.mubr.f32.gmra.mxu0 %v55
    %v257 = vpop.f32.mrf.mxu0
    %v258 = vadd.f32 %v44, %v257
    %v259 = vpop.f32.mrf.mxu0
    %v260 = vadd.f32 %v48, %v259
    %261 = vmatprep.mubr.f32.mxu0 0.0
    %262 = vmatmul.mubr.f32.gmra.mxu0 %v58
    %v263 = vpop.f32.mrf.mxu0
    %v264 = vadd.f32 %v44, %v263
    %v265 = vpop.f32.mrf.mxu0
    %v266 = vadd.f32 %v48, %v265
    %267 = vmatprep.mubr.f32.mxu0 0.0
    %268 = vmatmul.mubr.f32.gmra.mxu0 %v61
    %v269 = vpop.f32.mrf.mxu0
    %v270 = vadd.f32 %v44, %v269
    %v271 = vpop.f32.mrf.mxu0
    %v272 = vadd.f32 %v48, %v271
    %273 = vmatprep.mubr.f32.mxu0 0.0
    %274 = vmatmul.mubr.f32.gmra.mxu0 %v64
    %v275 = vpop.f32.mrf.mxu0
    %v276 = vadd.f32 %v44, %v275
    %v277 = vpop.f32.mrf.mxu0
    %v278 = vadd.f32 %v48, %v277
    %279 = vmatprep.mubr.f32.mxu0 0.0
    %280 = vmatmul.mubr.f32.gmra.mxu0 %v67
    %v281 = vpop.f32.mrf.mxu0
    %v282 = vadd.f32 %v44, %v281
    %v283 = vpop.f32.mrf.mxu0
    %v284 = vadd.f32 %v48, %v283
    %285 = vmatprep.mubr.f32.mxu0 0.0
    %286 = vmatmul.mubr.f32.gmra.mxu0 %v70
    %v287 = vpop.f32.mrf.mxu0
    %v288 = vadd.f32 %v44, %v287
    %v289 = vpop.f32.mrf.mxu0
    %v290 = vadd.f32 %v48, %v289
    %291 = vmatprep.mubr.f32.mxu0 0.0
    %292 = vmatmul.mubr.f32.gmra.mxu0 %v73
    %v293 = vpop.f32.mrf.mxu0
    %v294 = vadd.f32 %v44, %v293
    %v295 = vpop.f32.mrf.mxu0
    %v296 = vadd.f32 %v48, %v295
    %297 = vmatprep.mubr.f32.mxu0 0.0
    %298 = vmatmul.mubr.f32.gmra.mxu0 %v76
    %v299 = vpop.f32.mrf.mxu0
    %v300 = vadd.f32 %v44, %v299
    %v301 = vpop.f32.mrf.mxu0
    %v302 = vadd.f32 %v48, %v301
    %303 = vdwg.mxu0
    %304 = vst [vmem:[#allocation2] sm:$0xff] %v145
    %305 = vst [vmem:[#allocation2 + $0x8] sm:$0xff] %v147
    %306 = vst [vmem:[#allocation2 + $0x10] sm:$0xff] %v258
    %307 = vst [vmem:[#allocation2 + $0x18] sm:$0xff] %v260
    %308 = vst [vmem:[#allocation2 + $0x20] sm:$0xff] %v151
    %309 = vst [vmem:[#allocation2 + $0x28] sm:$0xff] %v153
    %310 = vst [vmem:[#allocation2 + $0x30] sm:$0xff] %v264
    %311 = vst [vmem:[#allocation2 + $0x38] sm:$0xff] %v266
    %312 = vst [vmem:[#allocation2 + $0x40] sm:$0xff] %v157
    %313 = vst [vmem:[#allocation2 + $0x48] sm:$0xff] %v159
    %314 = vst [vmem:[#allocation2 + $0x50] sm:$0xff] %v270
    %315 = vst [vmem:[#allocation2 + $0x58] sm:$0xff] %v272
    %316 = vst [vmem:[#allocation2 + $0x60] sm:$0xff] %v163
    %317 = vst [vmem:[#allocation2 + $0x68] sm:$0xff] %v165
    %318 = vst [vmem:[#allocation2 + $0x70] sm:$0xff] %v276
    %319 = vst [vmem:[#allocation2 + $0x78] sm:$0xff] %v278
    %320 = vst [vmem:[#allocation2 + $0x80] sm:$0xff] %v169
    %321 = vst [vmem:[#allocation2 + $0x88] sm:$0xff] %v171
    %322 = vst [vmem:[#allocation2 + $0x90] sm:$0xff] %v282
    %323 = vst [vmem:[#allocation2 + $0x98] sm:$0xff] %v284
    %324 = vst [vmem:[#allocation2 + $0xa0] sm:$0xff] %v175
    %325 = vst [vmem:[#allocation2 + $0xa8] sm:$0xff] %v177
    %326 = vst [vmem:[#allocation2 + $0xb0] sm:$0xff] %v288
    %327 = vst [vmem:[#allocation2 + $0xb8] sm:$0xff] %v290
    %328 = vst [vmem:[#allocation2 + $0xc0] sm:$0xff] %v181
    %329 = vst [vmem:[#allocation2 + $0xc8] sm:$0xff] %v183
    %330 = vst [vmem:[#allocation2 + $0xd0] sm:$0xff] %v294
    %331 = vst [vmem:[#allocation2 + $0xd8] sm:$0xff] %v296
    %332 = vst [vmem:[#allocation2 + $0xe0] sm:$0xff] %v187
    %333 = vst [vmem:[#allocation2 + $0xe8] sm:$0xff] %v189
    %334 = vst [vmem:[#allocation2 + $0xf0] sm:$0xff] %v300
    %335 = vst [vmem:[#allocation2 + $0xf8] sm:$0xff] %v302
    // Predicated region
    $region14: #{tpu_custom_call.1} parent=1 // pred_check
      _
    $region15: #{tpu_custom_call.1} parent=1 // pred_check_branch
      %337 = sbr.rel (0) target = $region17
    $region16: #{tpu_custom_call.1} parent=1 // pred_region
      %s339 = ssub.s32 4096, 4096
      %340 = vsyncadd [#allocation3], %s339
      %s341 = sshll.u32 [#allocation2], 4
      %s342 = int_to_ptr.vmem [resolvable:$true] %s341
      %347 = dma.vmem_to_hbm [thread:$0]  %s342, 4096, %s3, [#allocation3], 512, 512, 32
    $region17: #{tpu_custom_call.1} parent=1 // pred_fallthru
      _
    // Predicated region
    $region18: #{tpu_custom_call.1} parent=1 // pred_check
      _
    $region19: #{tpu_custom_call.1} parent=1 // pred_check_branch
      %349 = sbr.rel (0) target = $region21
    $region20: #{tpu_custom_call.1} parent=1 // pred_region
      %350 = dma.done [#allocation3], 4096
    $region21: #{tpu_custom_call.1} parent=1 // pred_fallthru
      _
    %351 = vsyncpa [#allocation3], 1

</llo_original>
